<compile_context>
chip_gen: v5e
topology: v5e:2x2
jax: 0.10.0
libtpu: 0.0.40
codegen_flags: <defaults>
</compile_context>

<pallas_src>
import jax
import jax.numpy as jnp
from jax.experimental import pallas as pl
from jax.experimental.pallas import tpu as pltpu


def _round_up(x: int, m: int) -> int:
    return ((x + m - 1) // m) * m


def _head_kernel(cls_ref, wpool_ref, bpool_ref, wfc_ref, bfc_ref, out_ref):
    """Fused BERT-pooler + classification head for one batch tile.

    cls_ref   : (tb, H)  bf16  -- CLS-token hidden states for this batch tile
    wpool_ref : (H, H)   bf16  -- pooler dense weight (in, out)
    bpool_ref : (1, H)   f32   -- pooler dense bias
    wfc_ref   : (H, Cp)  bf16  -- fc weight (in, out), zero-padded lanes
    bfc_ref   : (1, Cp)  f32   -- fc bias, zero-padded lanes
    out_ref   : (tb, Cp) bf16  -- sigmoid probabilities (lane-dense)
    """
    # BERT pooler: tanh(cls @ W_pool + b_pool); f32 accumulation on the MXU.
    pooled = jnp.tanh(
        jnp.dot(cls_ref[...], wpool_ref[...], preferred_element_type=jnp.float32)
        + bpool_ref[...]
    )

    # textFinetuning head: relu -> dropout -> linear -> sigmoid.
    feats = jnp.maximum(pooled, 0.0)
    # Dropout: inference-mode (identity).
    # TODO(synk): training-mode dropout would use pltpu.prng_seed +
    #             pltpu.stateful_bernoulli with 1/(1-p) scaling.
    logits = (
        jnp.dot(feats.astype(wfc_ref.dtype), wfc_ref[...],
                preferred_element_type=jnp.float32)
        + bfc_ref[...]
    )
    # Sigmoid in f32, cast on store (halves output writeback DMA).
    out_ref[...] = jax.nn.sigmoid(logits).astype(out_ref.dtype)


def text_finetuning_forward(last_hidden_state, w_pool, b_pool, w_fc, b_fc,
                            *, batch_tile=256):
    """Pallas forward: pooler + classification head on the CLS token.

    `batch_tile` default 256: amortizes per-step pipeline overhead and feeds
    full 256-row MXU passes on v6e/v7x for large B; tiny VMEM footprint.
    Returns bf16 probabilities of shape (B, C).
    """
    B, S, H = last_hidden_state.shape
    C = w_fc.shape[1]

    # Lane-dense classifier output (multiple of 128).
    C_pad = _round_up(max(C, 1), 128)

    # --- CLS slice BEFORE cast/pad: only (B, H) ever touches the kernel. ---
    cls = last_hidden_state[:, 0, :].astype(jnp.bfloat16)        # (B, H) bf16

    # Sublane-dense batch tile (multiple of 8; >=16 rows preferred for bf16).
    B8 = _round_up(B, 8)
    tb = min(_round_up(batch_tile, 8), B8)
    # v7x megacore: ensure >=2 grid steps when the batch permits so the
    # "parallel" axis actually shards across both TensorCores.
    if B8 >= 32:
        tb = min(tb, max(16, _round_up(B8 // 2, 8)))
    B_pad = _round_up(B, tb)
    if B_pad != B:
        cls = jnp.pad(cls, ((0, B_pad - B), (0, 0)))

    # bf16 weights (MXU-native), f32 biases; zero-pad fc lanes so padded
    # sigmoid lanes are harmless and sliced off below.
    wp = w_pool.astype(jnp.bfloat16)
    bp = b_pool.astype(jnp.float32)
    wf = jnp.pad(w_fc, ((0, 0), (0, C_pad - C))).astype(jnp.bfloat16)
    bf = jnp.pad(b_fc, ((0, 0), (0, C_pad - C))).astype(jnp.float32)

    grid = (B_pad // tb,)

    cost = pl.CostEstimate(
        flops=2 * B_pad * H * H + 2 * B_pad * H * C_pad,
        transcendentals=B_pad * H + B_pad * C_pad,      # tanh + sigmoid
        bytes_accessed=(B_pad * H * 2                   # CLS bf16 input
                        + H * H * 2 + H * C_pad * 2     # bf16 weights
                        + H * 4 + C_pad * 4             # f32 biases
                        + B_pad * C_pad * 2),           # bf16 output
    )

    # TODO(synk): for repeated serving calls with static weights, keep bf16
    #             w_pool/w_fc + biases resident in VMEM across calls (P10
    #             cross-call DMA/semaphore future) -- the per-call weight DMA
    #             dominates bytes for small batches.
    out = pl.pallas_call(
        _head_kernel,
        out_shape=jax.ShapeDtypeStruct((B_pad, C_pad), jnp.bfloat16),
        grid_spec=pltpu.PrefetchScalarGridSpec(
            num_scalar_prefetch=0,
            grid=grid,
            in_specs=[
                # 2D CLS block: plain lane-dense load, no in-kernel gather.
                pl.BlockSpec((tb, H), lambda i: (i, 0)),
                # Weights/biases pinned to a fixed block every grid step;
                # single-buffered since their block index never changes.
                pl.BlockSpec((H, H), lambda i: (0, 0),
                             pipeline_mode=pl.Buffered(1)),
                pl.BlockSpec((1, H), lambda i: (0, 0),
                             pipeline_mode=pl.Buffered(1)),
                pl.BlockSpec((H, C_pad), lambda i: (0, 0),
                             pipeline_mode=pl.Buffered(1)),
                pl.BlockSpec((1, C_pad), lambda i: (0, 0),
                             pipeline_mode=pl.Buffered(1)),
            ],
            out_specs=pl.BlockSpec((tb, C_pad), lambda i: (i, 0)),
        ),
        compiler_params=pltpu.CompilerParams(
            dimension_semantics=("parallel",),   # shard batch tiles across TCs
        ),
        cost_estimate=cost,
    )(cls, wp, bp, wf, bf)

    return out[:B, :C]


def reference_forward(last_hidden_state, w_pool, b_pool, w_fc, b_fc):
    """Pure-JAX f32 reference (the original module semantics)."""
    cls_tok = last_hidden_state[:, 0, :]
    pooled = jnp.tanh(cls_tok @ w_pool + b_pool)
    feats = jnp.maximum(pooled, 0.0)
    logits = feats @ w_fc + b_fc
    return jax.nn.sigmoid(logits)


def reference_forward_kernel_numerics(last_hidden_state, w_pool, b_pool,
                                      w_fc, b_fc):
    """Pure-JAX reference mirroring the kernel's exact casts (bf16 inputs,
    f32 MXU accumulation, bf16 feats before the classifier, bf16 output)."""
    cls_tok = last_hidden_state[:, 0, :].astype(jnp.bfloat16)
    wp = w_pool.astype(jnp.bfloat16)
    wf = w_fc.astype(jnp.bfloat16)
    pooled = jnp.tanh(
        jnp.dot(cls_tok, wp, preferred_element_type=jnp.float32)
        + b_pool.astype(jnp.float32))
    feats = jnp.maximum(pooled, 0.0).astype(jnp.bfloat16)
    logits = (jnp.dot(feats, wf, preferred_element_type=jnp.float32)
              + b_fc.astype(jnp.float32))
    return jax.nn.sigmoid(logits).astype(jnp.bfloat16)


if __name__ == "__main__":
    # Small, module-consistent shapes: batch=2, seq=8, hidden=128, classes=5.
    B, S, H, C = 2, 8, 128, 5

    key = jax.random.PRNGKey(0)
    k_x, k_wp, k_bp, k_wf, k_bf = jax.random.split(key, 5)

    # Synthetic BERT encoder output (stands in for text_module(**text)).
    last_hidden_state = jax.random.normal(k_x, (B, S, H), dtype=jnp.float32)

    # Pooler Linear(H->H) and fc Linear(H->C), stored as (in, out).
    w_pool = jax.random.normal(k_wp, (H, H), dtype=jnp.float32) * (1.0 / jnp.sqrt(H))
    b_pool = jax.random.normal(k_bp, (1, H), dtype=jnp.float32) * 0.02
    w_fc = jax.random.normal(k_wf, (H, C), dtype=jnp.float32) * (1.0 / jnp.sqrt(H))
    b_fc = jax.random.normal(k_bf, (1, C), dtype=jnp.float32) * 0.02

    pred = text_finetuning_forward(last_hidden_state, w_pool, b_pool, w_fc, b_fc)
    pred = jax.block_until_ready(pred)
    assert pred.shape == (B, C), pred.shape
    pred_f32 = pred.astype(jnp.float32)

    # Strict check vs a reference that mirrors the kernel's bf16 numerics.
    ref_bf16 = reference_forward_kernel_numerics(
        last_hidden_state, w_pool, b_pool, w_fc, b_fc).astype(jnp.float32)
    assert jnp.allclose(pred_f32, ref_bf16, atol=5e-3, rtol=5e-3), (
        f"max abs diff vs kernel-numerics ref "
        f"{jnp.max(jnp.abs(pred_f32 - ref_bf16))}"
    )

    # Looser check against the full-precision (original-module) reference.
    ref_f32 = reference_forward(last_hidden_state, w_pool, b_pool, w_fc, b_fc)
    assert jnp.allclose(pred_f32, ref_f32, atol=3e-2, rtol=3e-2), (
        f"max abs diff vs f32 ref {jnp.max(jnp.abs(pred_f32 - ref_f32))}"
    )

    print("KERNEL_OK")
</pallas_src>

<mosaic_0001>
module attributes {stable_mosaic.version = 11 : i64} {
  func.func @_head_kernel(%arg0: i32, %arg1: memref<8x128xbf16, #tpu.memory_space<vmem>>, %arg2: memref<128x128xbf16, #tpu.memory_space<vmem>>, %arg3: memref<1x128xf32, #tpu.memory_space<vmem>>, %arg4: memref<128x128xbf16, #tpu.memory_space<vmem>>, %arg5: memref<1x128xf32, #tpu.memory_space<vmem>>, %arg6: memref<8x128xbf16, #tpu.memory_space<vmem>>) attributes {dimension_semantics = [#tpu.dimension_semantics<parallel>], iteration_bounds = array<i64: 1>, scalar_prefetch = 0 : i64, scratch_operands = 0 : i64, tpu.core_type = #tpu.core_type<tc>, window_params = [{transform_indices = @transform_0, window_bounds = array<i64: 8, 128>}, {pipeline_mode = #tpu.pipeline_mode<synchronous>, transform_indices = @transform_1, window_bounds = array<i64: 128, 128>}, {pipeline_mode = #tpu.pipeline_mode<synchronous>, transform_indices = @transform_2, window_bounds = array<i64: 1, 128>}, {pipeline_mode = #tpu.pipeline_mode<synchronous>, transform_indices = @transform_3, window_bounds = array<i64: 128, 128>}, {pipeline_mode = #tpu.pipeline_mode<synchronous>, transform_indices = @transform_4, window_bounds = array<i64: 1, 128>}, {transform_indices = @transform_5, window_bounds = array<i64: 8, 128>}]} {
    %c0 = arith.constant 0 : index
    %c0_0 = arith.constant 0 : index
    %0 = vector.load %arg1[%c0, %c0_0] : memref<8x128xbf16, #tpu.memory_space<vmem>>, vector<8x128xbf16>
    %c0_1 = arith.constant 0 : index
    %c0_2 = arith.constant 0 : index
    %1 = vector.load %arg2[%c0_1, %c0_2] : memref<128x128xbf16, #tpu.memory_space<vmem>>, vector<128x128xbf16>
    %cst = arith.constant dense<0.000000e+00> : vector<8x128xf32>
    %2 = tpu.matmul %0, %1, %cst {dimension_numbers = #tpu.dot_dimension_numbers<[1], [0], [0], [1], [0, 0, 1, 1], [], []>} : vector<8x128xbf16>, vector<128x128xbf16>, vector<8x128xf32> -> vector<8x128xf32>
    %c0_3 = arith.constant 0 : index
    %c0_4 = arith.constant 0 : index
    %3 = vector.load %arg3[%c0_3, %c0_4] : memref<1x128xf32, #tpu.memory_space<vmem>>, vector<1x128xf32>
    %4 = vector.broadcast %3 : vector<1x128xf32> to vector<8x128xf32>
    %5 = arith.addf %2, %4 : vector<8x128xf32>
    %6 = math.tanh %5 : vector<8x128xf32>
    %cst_5 = arith.constant 0.000000e+00 : f32
    %7 = vector.broadcast %cst_5 : f32 to vector<8x128xf32>
    %8 = arith.maximumf %6, %7 : vector<8x128xf32>
    %9 = arith.truncf %8 : vector<8x128xf32> to vector<8x128xbf16>
    %c0_6 = arith.constant 0 : index
    %c0_7 = arith.constant 0 : index
    %10 = vector.load %arg4[%c0_6, %c0_7] : memref<128x128xbf16, #tpu.memory_space<vmem>>, vector<128x128xbf16>
    %cst_8 = arith.constant dense<0.000000e+00> : vector<8x128xf32>
    %11 = tpu.matmul %9, %10, %cst_8 {dimension_numbers = #tpu.dot_dimension_numbers<[1], [0], [0], [1], [0, 0, 1, 1], [], []>} : vector<8x128xbf16>, vector<128x128xbf16>, vector<8x128xf32> -> vector<8x128xf32>
    %c0_9 = arith.constant 0 : index
    %c0_10 = arith.constant 0 : index
    %12 = vector.load %arg5[%c0_9, %c0_10] : memref<1x128xf32, #tpu.memory_space<vmem>>, vector<1x128xf32>
    %13 = vector.broadcast %12 : vector<1x128xf32> to vector<8x128xf32>
    %14 = arith.addf %11, %13 : vector<8x128xf32>
    %15 = arith.negf %14 : vector<8x128xf32>
    %16 = math.exp %15 : vector<8x128xf32>
    %cst_11 = arith.constant 1.000000e+00 : f32
    %17 = vector.broadcast %cst_11 : f32 to vector<8x128xf32>
    %18 = arith.addf %17, %16 : vector<8x128xf32>
    %19 = arith.divf %17, %18 : vector<8x128xf32>
    %20 = arith.truncf %19 : vector<8x128xf32> to vector<8x128xbf16>
    %c0_12 = arith.constant 0 : index
    %c0_13 = arith.constant 0 : index
    %21 = vector.load %arg6[%c0_12, %c0_13] : memref<8x128xbf16, #tpu.memory_space<vmem>>, vector<8x128xbf16>
    tpu.vector_store %arg6[%c0_12, %c0_13], %20 {strides = array<i32>} : memref<8x128xbf16, #tpu.memory_space<vmem>>, vector<8x128xbf16>,
    return
  }
  func.func @transform_0(%arg0: i32) -> (i32, i32) {
    %c0_i32 = arith.constant 0 : i32
    %c0_i32_0 = arith.constant 0 : i32
    return %arg0, %c0_i32 : i32, i32
  }
  func.func @transform_1(%arg0: i32) -> (i32, i32) {
    %c0_i32 = arith.constant 0 : i32
    %c0_i32_0 = arith.constant 0 : i32
    %c0_i32_1 = arith.constant 0 : i32
    return %c0_i32, %c0_i32_0 : i32, i32
  }
  func.func @transform_2(%arg0: i32) -> (i32, i32) {
    %c0_i32 = arith.constant 0 : i32
    %c0_i32_0 = arith.constant 0 : i32
    %c0_i32_1 = arith.constant 0 : i32
    return %c0_i32, %c0_i32_0 : i32, i32
  }
  func.func @transform_3(%arg0: i32) -> (i32, i32) {
    %c0_i32 = arith.constant 0 : i32
    %c0_i32_0 = arith.constant 0 : i32
    %c0_i32_1 = arith.constant 0 : i32
    return %c0_i32, %c0_i32_0 : i32, i32
  }
  func.func @transform_4(%arg0: i32) -> (i32, i32) {
    %c0_i32 = arith.constant 0 : i32
    %c0_i32_0 = arith.constant 0 : i32
    %c0_i32_1 = arith.constant 0 : i32
    return %c0_i32, %c0_i32_0 : i32, i32
  }
  func.func @transform_5(%arg0: i32) -> (i32, i32) {
    %c0_i32 = arith.constant 0 : i32
    %c0_i32_0 = arith.constant 0 : i32
    return %arg0, %c0_i32 : i32, i32
  }
}

</mosaic_0001>

<llo_original>
// kernel: tpu_custom_call.1
$region0: #{tpu_custom_call.1}
  #allocation0 [shape = 'u32[]', space=smem, size = 0x4, offset = 0x4, fixed_abs, tag = 'smem constant byte address 0x4 - core index']
  #allocation1 [shape = 'u32[72,128]{1,0:T(1,128)}', space=vmem, size = 0x9000, scoped, tag = 'internal scratch']
  %s0 = inlined_call_operand.hbm [shape: bf16[8,128], index: 0, kind: input, shape index: {}]
  %s1 = inlined_call_operand.hbm [shape: bf16[128,128], index: 1, kind: input, shape index: {}]
  %s2 = inlined_call_operand.vmem [shape: f32[1,128], index: 2, kind: input, shape index: {}]
  %s3 = inlined_call_operand.hbm [shape: bf16[128,128], index: 3, kind: input, shape index: {}]
  %s4 = inlined_call_operand.vmem [shape: f32[1,128], index: 4, kind: input, shape index: {}]
  %s5 = inlined_call_operand.hbm [shape: bf16[8,128], index: 5, kind: output, shape index: {}]
  %s6 = sld [smem:[#allocation0]]
  $region42: #{tpu_custom_call.1} parent=0
    _
  %s8 = ssub.s32 1, %s6
  %s9 = scalar_select 0, %s8, %s6
  $region1: #{tpu_custom_call.1} parent=0
    #allocation2 [shape = 'u8[2048]{0}', space=vmem, size = 0x800, scoped, tag = 'input window, operand 0, single buffered']
    #allocation3 [shape = 's32[1]{0}', space=sflag, size = 0x4, scoped, tag = 'scoped memory for tpu_custom_call.1']
    #allocation4 [shape = 's32[1]{0}', space=sflag, size = 0x4, scoped, tag = 'scoped memory for tpu_custom_call.1']
    #allocation5 [shape = 'u8[32768]{0}', space=vmem, size = 0x8000, scoped, tag = 'input window, operand 1, single buffered']
    #allocation6 [shape = 's32[1]{0}', space=sflag, size = 0x4, scoped, tag = 'scoped memory for tpu_custom_call.1']
    #allocation7 [shape = 'u8[32768]{0}', space=vmem, size = 0x8000, scoped, tag = 'input window, operand 3, single buffered']
    #allocation8 [shape = 'u8[2048]{0}', space=vmem, size = 0x800, scoped, tag = 'output window, operand 0, single buffered']
    %10 = vsyncpa [#allocation3], 0
    %11 = vsyncpa [#allocation6], 0
    %12 = vsyncpa [#allocation4], 0
    // Predicated region
    $region2: #{tpu_custom_call.1} parent=1 // pred_check
      _
    $region3: #{tpu_custom_call.1} parent=1 // pred_check_branch
      %14 = sbr.rel (0) target = $region5
    $region4: #{tpu_custom_call.1} parent=1 // pred_region
      %16 = vsyncadd [#allocation3], 0
      %s18 = sshll.u32 %s0, 4
      %s19 = int_to_ptr.hbm [resolvable:$true] %s18
      %s20 = sshll.u32 [#allocation2], 4
      %s21 = int_to_ptr.vmem [resolvable:$true] %s20
      %23 = dma.hbm_to_vmem [thread:$0]  %s19, 64, %s21, [#allocation3]
    $region5: #{tpu_custom_call.1} parent=1 // pred_fallthru
      _
    // Predicated region
    $region6: #{tpu_custom_call.1} parent=1 // pred_check
      _
    $region7: #{tpu_custom_call.1} parent=1 // pred_check_branch
      %25 = sbr.rel (0) target = $region9
    $region8: #{tpu_custom_call.1} parent=1 // pred_region
      %27 = vsyncadd [#allocation6], 0
      %s28 = sshll.u32 %s1, 4
      %s29 = int_to_ptr.hbm [resolvable:$true] %s28
      %s30 = sshll.u32 [#allocation5], 4
      %s31 = int_to_ptr.vmem [resolvable:$true] %s30
      %36 = dma.hbm_to_vmem [thread:$0]  %s29, 1024, %s31, [#allocation6], 64, 64, 4
    $region9: #{tpu_custom_call.1} parent=1 // pred_fallthru
      _
    // Predicated region
    $region10: #{tpu_custom_call.1} parent=1 // pred_check
      _
    $region11: #{tpu_custom_call.1} parent=1 // pred_check_branch
      %38 = sbr.rel (0) target = $region13
    $region12: #{tpu_custom_call.1} parent=1 // pred_region
      _
    $region13: #{tpu_custom_call.1} parent=1 // pred_fallthru
      _
    // Predicated region
    $region14: #{tpu_custom_call.1} parent=1 // pred_check
      _
    $region15: #{tpu_custom_call.1} parent=1 // pred_check_branch
      %40 = sbr.rel (0) target = $region17
    $region16: #{tpu_custom_call.1} parent=1 // pred_region
      %42 = vsyncadd [#allocation6], 0
      %s43 = sshll.u32 %s3, 4
      %s44 = int_to_ptr.hbm [resolvable:$true] %s43
      %s45 = sshll.u32 [#allocation7], 4
      %s46 = int_to_ptr.vmem [resolvable:$true] %s45
      %51 = dma.hbm_to_vmem [thread:$0]  %s44, 1024, %s46, [#allocation6], 64, 64, 4
    $region17: #{tpu_custom_call.1} parent=1 // pred_fallthru
      _
    // Predicated region
    $region18: #{tpu_custom_call.1} parent=1 // pred_check
      _
    $region19: #{tpu_custom_call.1} parent=1 // pred_check_branch
      %53 = sbr.rel (0) target = $region21
    $region20: #{tpu_custom_call.1} parent=1 // pred_region
      _
    $region21: #{tpu_custom_call.1} parent=1 // pred_fallthru
      _
    // Predicated region
    $region22: #{tpu_custom_call.1} parent=1 // pred_check
      _
    $region23: #{tpu_custom_call.1} parent=1 // pred_check_branch
      %55 = sbr.rel (0) target = $region25
    $region24: #{tpu_custom_call.1} parent=1 // pred_region
      %57 = dma.done [#allocation3], 64
    $region25: #{tpu_custom_call.1} parent=1 // pred_fallthru
      _
    // Predicated region
    $region26: #{tpu_custom_call.1} parent=1 // pred_check
      _
    $region27: #{tpu_custom_call.1} parent=1 // pred_check_branch
      %59 = sbr.rel (0) target = $region29
    $region28: #{tpu_custom_call.1} parent=1 // pred_region
      %61 = dma.done [#allocation6], 1024
    $region29: #{tpu_custom_call.1} parent=1 // pred_fallthru
      _
    // Predicated region
    $region30: #{tpu_custom_call.1} parent=1 // pred_check
      _
    $region31: #{tpu_custom_call.1} parent=1 // pred_check_branch
      %63 = sbr.rel (0) target = $region33
    $region32: #{tpu_custom_call.1} parent=1 // pred_region
      %65 = dma.done [#allocation6], 1024
    $region33: #{tpu_custom_call.1} parent=1 // pred_fallthru
      _
    %v66 = vld [vmem:[#allocation2] sm:$0xf]
    %v67 = vld [vmem:[#allocation5] sm:$0xf]
    %v68 = vld [vmem:[#allocation5 + $0x4] sm:$0xf]
    %v69 = vld [vmem:[#allocation5 + $0x8] sm:$0xf]
    %v70 = vld [vmem:[#allocation5 + $0xc] sm:$0xf]
    %v71 = vld [vmem:[#allocation5 + $0x10] sm:$0xf]
    %v72 = vld [vmem:[#allocation5 + $0x14] sm:$0xf]
    %v73 = vld [vmem:[#allocation5 + $0x18] sm:$0xf]
    %v74 = vld [vmem:[#allocation5 + $0x1c] sm:$0xf]
    %v75 = vld [vmem:[#allocation5 + $0x20] sm:$0xf]
    %v76 = vld [vmem:[#allocation5 + $0x24] sm:$0xf]
    %v77 = vld [vmem:[#allocation5 + $0x28] sm:$0xf]
    %v78 = vld [vmem:[#allocation5 + $0x2c] sm:$0xf]
    %v79 = vld [vmem:[#allocation5 + $0x30] sm:$0xf]
    %v80 = vld [vmem:[#allocation5 + $0x34] sm:$0xf]
    %v81 = vld [vmem:[#allocation5 + $0x38] sm:$0xf]
    %v82 = vld [vmem:[#allocation5 + $0x3c] sm:$0xf]
    %v83 = vld [vmem:[%s2] sm:$0x1]
    %v85 = vperm.slane %v83, 0
    %v103 = vunpack.c.l.b16 %v67
    %v104 = vunpack.c.l.b16 %v68
    %v105 = vunpack.c.l.b16 %v69
    %v106 = vunpack.c.l.b16 %v70
    %v107 = vunpack.c.l.b16 %v71
    %v108 = vunpack.c.l.b16 %v72
    %v109 = vunpack.c.l.b16 %v73
    %v110 = vunpack.c.l.b16 %v74
    %v111 = vunpack.c.l.b16 %v75
    %v112 = vunpack.c.l.b16 %v76
    %v113 = vunpack.c.l.b16 %v77
    %v114 = vunpack.c.l.b16 %v78
    %v115 = vunpack.c.l.b16 %v79
    %v116 = vunpack.c.l.b16 %v80
    %v117 = vunpack.c.l.b16 %v81
    %v118 = vunpack.c.l.b16 %v82
    %v119 = vpack.c.b16 %v104, %v103
    %v120 = vpack.c.b16 %v106, %v105
    %v121 = vpack.c.b16 %v108, %v107
    %v122 = vpack.c.b16 %v110, %v109
    %v123 = vpack.c.b16 %v112, %v111
    %v124 = vpack.c.b16 %v114, %v113
    %v125 = vpack.c.b16 %v116, %v115
    %v126 = vpack.c.b16 %v118, %v117
    %135 = vmatpush.bf16.msra.mxu0 %v126
    %136 = vmatpush.bf16.msra.mxu0 %v125
    %137 = vmatpush.bf16.msra.mxu0 %v124
    %138 = vmatpush.bf16.msra.mxu0 %v123
    %139 = vmatpush.bf16.msra.mxu0 %v122
    %140 = vmatpush.bf16.msra.mxu0 %v121
    %141 = vmatpush.bf16.msra.mxu0 %v120
    %142 = vmatpush.bf16.msra.mxu0 %v119
    %143 = vmatmul.bf16.gmra.mxu0 %v66
    %v144 = vpop.f32.mrf.mxu0
    %v145 = vadd.f32 %v85, %v144
    %v146 = vpop.f32.mrf.mxu0
    %147 = vdwg.mxu0
    %v148 = vtanh.pop %v145
    %v149 = vmax.f32 %v148, 0.0
    %v150 = vpack.c.bf16 %v149, %v149
    %v151 = vld [vmem:[#allocation7] sm:$0xf]
    %v152 = vld [vmem:[#allocation7 + $0x4] sm:$0xf]
    %v153 = vld [vmem:[#allocation7 + $0x8] sm:$0xf]
    %v154 = vld [vmem:[#allocation7 + $0xc] sm:$0xf]
    %v155 = vld [vmem:[#allocation7 + $0x10] sm:$0xf]
    %v156 = vld [vmem:[#allocation7 + $0x14] sm:$0xf]
    %v157 = vld [vmem:[#allocation7 + $0x18] sm:$0xf]
    %v158 = vld [vmem:[#allocation7 + $0x1c] sm:$0xf]
    %v159 = vld [vmem:[#allocation7 + $0x20] sm:$0xf]
    %v160 = vld [vmem:[#allocation7 + $0x24] sm:$0xf]
    %v161 = vld [vmem:[#allocation7 + $0x28] sm:$0xf]
    %v162 = vld [vmem:[#allocation7 + $0x2c] sm:$0xf]
    %v163 = vld [vmem:[#allocation7 + $0x30] sm:$0xf]
    %v164 = vld [vmem:[#allocation7 + $0x34] sm:$0xf]
    %v165 = vld [vmem:[#allocation7 + $0x38] sm:$0xf]
    %v166 = vld [vmem:[#allocation7 + $0x3c] sm:$0xf]
    %v167 = vld [vmem:[%s4] sm:$0x1]
    %v169 = vperm.slane %v167, 0
    %v187 = vunpack.c.l.b16 %v151
    %v188 = vunpack.c.l.b16 %v152
    %v189 = vunpack.c.l.b16 %v153
    %v190 = vunpack.c.l.b16 %v154
    %v191 = vunpack.c.l.b16 %v155
    %v192 = vunpack.c.l.b16 %v156
    %v193 = vunpack.c.l.b16 %v157
    %v194 = vunpack.c.l.b16 %v158
    %v195 = vunpack.c.l.b16 %v159
    %v196 = vunpack.c.l.b16 %v160
    %v197 = vunpack.c.l.b16 %v161
    %v198 = vunpack.c.l.b16 %v162
    %v199 = vunpack.c.l.b16 %v163
    %v200 = vunpack.c.l.b16 %v164
    %v201 = vunpack.c.l.b16 %v165
    %v202 = vunpack.c.l.b16 %v166
    %v203 = vpack.c.b16 %v188, %v187
    %v204 = vpack.c.b16 %v190, %v189
    %v205 = vpack.c.b16 %v192, %v191
    %v206 = vpack.c.b16 %v194, %v193
    %v207 = vpack.c.b16 %v196, %v195
    %v208 = vpack.c.b16 %v198, %v197
    %v209 = vpack.c.b16 %v200, %v199
    %v210 = vpack.c.b16 %v202, %v201
    %219 = vmatpush.bf16.msra.mxu0 %v210
    %220 = vmatpush.bf16.msra.mxu0 %v209
    %221 = vmatpush.bf16.msra.mxu0 %v208
    %222 = vmatpush.bf16.msra.mxu0 %v207
    %223 = vmatpush.bf16.msra.mxu0 %v206
    %224 = vmatpush.bf16.msra.mxu0 %v205
    %225 = vmatpush.bf16.msra.mxu0 %v204
    %226 = vmatpush.bf16.msra.mxu0 %v203
    %227 = vmatmul.bf16.gmra.mxu0 %v150
    %v228 = vpop.f32.mrf.mxu0
    %v229 = vadd.f32 %v169, %v228
    %v230 = vpop.f32.mrf.mxu0
    %231 = vdwg.mxu0
    %v232 = vxor.u32 %v229, 2147483648
    %v233 = vmul.f32 %v232, 1.442695
    %v234 = vpow.pop %v233
    %v235 = vadd.f32 %v234, 1.0
    %v236 = vrcp.pop %v235
    %v237 = vmul.f32 %v235, %v236
    %v238 = vsub.f32 1.0, %v237
    %v239 = vmul.f32 %v236, %v238
    %v240 = vadd.f32 %v236, %v239
    %vm241 = vweird.f32 %v235
    %vm242 = vweird.f32 %v236
    %vm243 = vmor %vm241, %vm242
    %v244 = vsel %vm243, %v236, %v240
    %v245 = vand.u32 2147483647, %v235
    %vm246 = vcmp.eq.f32.partialorder %v245, 8.507059e+37
    %v247 = vand.u32 %v235, 2147483648
    %v248 = vor.u32 1.1754944e-38, %v247
    %v249 = vsel %vm246, %v248, %v244
    %v250 = vmul.f32 1.0, %v249
    %v251 = vpack.c.bf16 %v250, %v250
    %252 = vst [vmem:[#allocation8] sm:$0xf] %v251
    // Predicated region
    $region34: #{tpu_custom_call.1} parent=1 // pred_check
      _
    $region35: #{tpu_custom_call.1} parent=1 // pred_check_branch
      %254 = sbr.rel (0) target = $region37
    $region36: #{tpu_custom_call.1} parent=1 // pred_region
      %256 = vsyncadd [#allocation4], 0
      %s258 = sshll.u32 [#allocation8], 4
      %s259 = int_to_ptr.vmem [resolvable:$true] %s258
      %s260 = sshll.u32 %s5, 4
      %s261 = int_to_ptr.hbm [resolvable:$true] %s260
      %263 = dma.vmem_to_hbm [thread:$0]  %s259, 64, %s261, [#allocation4]
    $region37: #{tpu_custom_call.1} parent=1 // pred_fallthru
      _
    // Predicated region
    $region38: #{tpu_custom_call.1} parent=1 // pred_check
      _
    $region39: #{tpu_custom_call.1} parent=1 // pred_check_branch
      %265 = sbr.rel (0) target = $region41
    $region40: #{tpu_custom_call.1} parent=1 // pred_region
      %267 = dma.done [#allocation4], 64
    $region41: #{tpu_custom_call.1} parent=1 // pred_fallthru
      _
    %268 = vsyncpa [#allocation3], 1
    %269 = vsyncpa [#allocation6], 1
    %270 = vsyncpa [#allocation4], 1

</llo_original>
